<compile_context>
chip_gen: v6e
topology: v6e:2x2x1
jax: 0.10.0
libtpu: 0.0.40
codegen_flags: <defaults>
</compile_context>

<pallas_src>
import functools

import jax
import jax.numpy as jnp
from jax.experimental import pallas as pl
from jax.experimental.pallas import tpu as pltpu


def _agg_stgcn_kernel(x_ref, a_ref, out_ref, *, kernel_size, seq_len, fifo_size, stride):
    """x_ref: (K, rows, V), a_ref: (K, V, V), out_ref: (rows, V), all f32.

    rows = c_tile * T, with row index = c_local * T + t (tiles aligned to channel boundaries).
    """
    # Spatial aggregation: sum over the K graph partitions of (rows, V) @ (V, V) on the MXU.
    s = jnp.dot(x_ref[0], a_ref[0], preferred_element_type=jnp.float32)
    for k in range(1, kernel_size):
        s = s + jnp.dot(x_ref[k], a_ref[k], preferred_element_type=jnp.float32)

    # Strided causal FIFO sum (zero-initialized FIFO): tap m adds s at time t - m*stride.
    out = s                                                              # tap m = 0
    taps = [d for d in range(stride, fifo_size, stride) if d < seq_len]  # skip dead taps
    if taps:
        rows = out_ref.shape[0]
        row_t = jax.lax.broadcasted_iota(jnp.int32, (rows, 1), 0) % seq_len  # hoisted once
        for d in taps:
            shifted = pltpu.roll(s, shift=d, axis=0)            # row r <- row r - d (wraps)
            out = out + shifted * (row_t >= d).astype(s.dtype)  # causal mask, multiply-add
    out_ref[...] = out.astype(out_ref.dtype)


def _pick_c_tile(c, t, max_rows):
    """Largest channel tile whose (c_tile*T, V) block is (8,128)-legal and fits the row budget."""
    cands = [d for d in range(1, c + 1)
             if c % d == 0 and (d * t) % 8 == 0 and d * t <= max_rows]
    return max(cands) if cands else c   # fall back to a single full-extent block (always legal)


@functools.partial(jax.jit,
                   static_argnames=("fifo_size", "stride", "out_channels", "max_rows_per_tile"))
def aggregate_stgcn(x, graph, *, fifo_size, stride, out_channels, max_rows_per_tile=2048):
    """x: (1, K*C, T, V) float32, graph: (K, V, V) float32 -> (1, C, T, V) float32."""
    n, kc, t, v = x.shape
    assert n == 1, "module FIFO state is batch-1; forward requires N == 1"
    c = out_channels
    k = kc // c
    assert k * c == kc and graph.shape == (k, v, v)

    # Pure reshape (bitcast under jit, no HBM pass): (1, K*C, T, V) -> (K, C*T, V), row = c*T + t.
    xr = x.reshape(k, c * t, v)
    a = graph.astype(jnp.float32)

    c_tile = _pick_c_tile(c, t, max_rows_per_tile)
    rows_tile = c_tile * t
    grid = (c // c_tile,)

    kern = functools.partial(_agg_stgcn_kernel, kernel_size=k, seq_len=t,
                             fifo_size=fifo_size, stride=stride)

    s = pl.pallas_call(
        kern,
        out_shape=jax.ShapeDtypeStruct((c * t, v), jnp.float32),
        grid_spec=pltpu.PrefetchScalarGridSpec(
            num_scalar_prefetch=0,
            grid=grid,
            in_specs=[
                pl.BlockSpec((k, rows_tile, v), lambda i: (0, i, 0)),  # x row tile (all K at once)
                pl.BlockSpec((k, v, v), lambda i: (0, 0, 0)),          # A, resident across tiles
            ],
            out_specs=pl.BlockSpec((rows_tile, v), lambda i: (i, 0)),
        ),
        compiler_params=pltpu.CompilerParams(dimension_semantics=("parallel",)),
    )(xr, a)

    # (C*T, V) -> (1, C, T, V): pure reshape, no post-transpose.
    return s.reshape(1, c, t, v)


def _reference(x, graph, fifo_size, stride, out_channels):
    """Pure-JAX f32 transcription of the PyTorch forward (zero-initialized FIFO)."""
    n, kc, t, v = x.shape
    c = out_channels
    k = kc // c
    xs = x.reshape(n, k, c, t, v)
    y = xs.transpose(0, 3, 1, 2, 4)                       # (N, T, K, C, V)
    z = jnp.einsum('ntkcv,kvw->ntcw', y, graph)           # graph matmul + sum over K
    taps = list(range(0, fifo_size, stride))
    outs = []
    for ti in range(t):
        b = jnp.zeros((n, c, v), jnp.float32)
        for j in taps:
            if ti - j >= 0:
                b = b + z[:, ti - j]
        outs.append(b)
    return jnp.stack(outs, axis=2)                        # (N, C, T, V)


if __name__ == "__main__":
    # TODO(synk): persistent self.fifo state across multiple forward calls is not modeled;
    # the kernel matches the first call with a zero-initialized FIFO.
    key = jax.random.PRNGKey(0)
    N, C, K, T, V = 1, 8, 3, 8, 16          # out_channels=8, kernel_size=3, seq=8, joints=16
    fifo_size, stride = 6, 2                # taps at t-0, t-2, t-4

    kx, ka = jax.random.split(key)
    x = jax.random.normal(kx, (N, K * C, T, V), dtype=jnp.float32)
    graph = jax.random.normal(ka, (K, V, V), dtype=jnp.float32)   # deterministic "graph" buffer

    # max_rows_per_tile=32 -> c_tile=4 -> two "parallel" row tiles (exercises the tiled path).
    out = aggregate_stgcn(x, graph, fifo_size=fifo_size, stride=stride,
                          out_channels=C, max_rows_per_tile=32)
    out = jax.block_until_ready(out)

    ref = _reference(x, graph, fifo_size, stride, C)
    assert out.shape == (N, C, T, V)
    err = float(jnp.max(jnp.abs(out - ref)))
    scale = float(jnp.max(jnp.abs(ref))) + 1e-6
    assert err / scale < 2e-2, f"mismatch vs reference: rel-max err {err / scale:.4g}"
    print("KERNEL_OK")
</pallas_src>

<mosaic_0001>
module attributes {stable_mosaic.version = 11 : i64} {
  func.func @_agg_stgcn_kernel(%arg0: i32, %arg1: memref<3x32x16xf32, #tpu.memory_space<vmem>>, %arg2: memref<3x16x16xf32, #tpu.memory_space<vmem>>, %arg3: memref<32x16xf32, #tpu.memory_space<vmem>>) attributes {dimension_semantics = [#tpu.dimension_semantics<parallel>], iteration_bounds = array<i64: 2>, scalar_prefetch = 0 : i64, scratch_operands = 0 : i64, tpu.core_type = #tpu.core_type<tc>, window_params = [{transform_indices = @transform_0, window_bounds = array<i64: 3, 32, 16>}, {pipeline_mode = #tpu.pipeline_mode<synchronous>, transform_indices = @transform_1, window_bounds = array<i64: 3, 16, 16>}, {transform_indices = @transform_2, window_bounds = array<i64: 32, 16>}]} {
    %c0 = arith.constant 0 : index
    %c0_0 = arith.constant 0 : index
    %c0_1 = arith.constant 0 : index
    %0 = vector.load %arg1[%c0, %c0_0, %c0_1] : memref<3x32x16xf32, #tpu.memory_space<vmem>>, vector<1x32x16xf32>
    %1 = vector.shape_cast %0 : vector<1x32x16xf32> to vector<32x16xf32>
    %c0_2 = arith.constant 0 : index
    %c0_3 = arith.constant 0 : index
    %c0_4 = arith.constant 0 : index
    %2 = vector.load %arg2[%c0_2, %c0_3, %c0_4] : memref<3x16x16xf32, #tpu.memory_space<vmem>>, vector<1x16x16xf32>
    %3 = vector.shape_cast %2 : vector<1x16x16xf32> to vector<16x16xf32>
    %cst = arith.constant dense<0.000000e+00> : vector<32x16xf32>
    %4 = tpu.matmul %1, %3, %cst {dimension_numbers = #tpu.dot_dimension_numbers<[1], [0], [0], [1], [0, 0, 1, 1], [], []>} : vector<32x16xf32>, vector<16x16xf32>, vector<32x16xf32> -> vector<32x16xf32>
    %c1 = arith.constant 1 : index
    %c0_5 = arith.constant 0 : index
    %c0_6 = arith.constant 0 : index
    %5 = vector.load %arg1[%c1, %c0_5, %c0_6] : memref<3x32x16xf32, #tpu.memory_space<vmem>>, vector<1x32x16xf32>
    %6 = vector.shape_cast %5 : vector<1x32x16xf32> to vector<32x16xf32>
    %c1_7 = arith.constant 1 : index
    %c0_8 = arith.constant 0 : index
    %c0_9 = arith.constant 0 : index
    %7 = vector.load %arg2[%c1_7, %c0_8, %c0_9] : memref<3x16x16xf32, #tpu.memory_space<vmem>>, vector<1x16x16xf32>
    %8 = vector.shape_cast %7 : vector<1x16x16xf32> to vector<16x16xf32>
    %cst_10 = arith.constant dense<0.000000e+00> : vector<32x16xf32>
    %9 = tpu.matmul %6, %8, %cst_10 {dimension_numbers = #tpu.dot_dimension_numbers<[1], [0], [0], [1], [0, 0, 1, 1], [], []>} : vector<32x16xf32>, vector<16x16xf32>, vector<32x16xf32> -> vector<32x16xf32>
    %10 = arith.addf %4, %9 : vector<32x16xf32>
    %c2 = arith.constant 2 : index
    %c0_11 = arith.constant 0 : index
    %c0_12 = arith.constant 0 : index
    %11 = vector.load %arg1[%c2, %c0_11, %c0_12] : memref<3x32x16xf32, #tpu.memory_space<vmem>>, vector<1x32x16xf32>
    %12 = vector.shape_cast %11 : vector<1x32x16xf32> to vector<32x16xf32>
    %c2_13 = arith.constant 2 : index
    %c0_14 = arith.constant 0 : index
    %c0_15 = arith.constant 0 : index
    %13 = vector.load %arg2[%c2_13, %c0_14, %c0_15] : memref<3x16x16xf32, #tpu.memory_space<vmem>>, vector<1x16x16xf32>
    %14 = vector.shape_cast %13 : vector<1x16x16xf32> to vector<16x16xf32>
    %cst_16 = arith.constant dense<0.000000e+00> : vector<32x16xf32>
    %15 = tpu.matmul %12, %14, %cst_16 {dimension_numbers = #tpu.dot_dimension_numbers<[1], [0], [0], [1], [0, 0, 1, 1], [], []>} : vector<32x16xf32>, vector<16x16xf32>, vector<32x16xf32> -> vector<32x16xf32>
    %16 = arith.addf %10, %15 : vector<32x16xf32>
    %17 = tpu.iota {dimensions = array<i32: 0>} : vector<32x1xi32>
    %c8_i32 = arith.constant 8 : i32
    %c0_i32 = arith.constant 0 : i32
    %18 = arith.cmpi eq, %c8_i32, %c0_i32 : i32
    %c1_i32 = arith.constant 1 : i32
    %19 = arith.select %18, %c1_i32, %c8_i32 : i32
    %20 = vector.broadcast %19 : i32 to vector<32x1xi32>
    %21 = arith.remsi %17, %20 : vector<32x1xi32>
    %c0_i32_17 = arith.constant 0 : i32
    %22 = vector.broadcast %c0_i32_17 : i32 to vector<32x1xi32>
    %23 = arith.cmpi ne, %21, %22 : vector<32x1xi32>
    %c0_i32_18 = arith.constant 0 : i32
    %24 = vector.broadcast %c0_i32_18 : i32 to vector<32x1xi32>
    %25 = arith.cmpi slt, %21, %24 : vector<32x1xi32>
    %c0_i32_19 = arith.constant 0 : i32
    %26 = arith.cmpi slt, %19, %c0_i32_19 : i32
    %27 = vector.broadcast %26 : i1 to vector<32x1xi1>
    %28 = vector.broadcast %27 : vector<32x1xi1> to vector<32x1xi1>
    %29 = arith.xori %25, %28 : vector<32x1xi1>
    %30 = arith.andi %29, %23 : vector<32x1xi1>
    %31 = vector.broadcast %19 : i32 to vector<32x1xi32>
    %32 = arith.addi %21, %31 : vector<32x1xi32>
    %33 = arith.select %30, %32, %21 : vector<32x1xi1>, vector<32x1xi32>
    %c2_i32 = arith.constant 2 : i32
    %34 = tpu.dynamic_rotate %16 by %c2_i32 dim 0 : vector<32x16xf32>, i32 -> vector<32x16xf32>
    %c2_i32_20 = arith.constant 2 : i32
    %35 = vector.broadcast %c2_i32_20 : i32 to vector<32x1xi32>
    %36 = arith.cmpi sge, %33, %35 : vector<32x1xi32>
    %37 = arith.extui %36 : vector<32x1xi1> to vector<32x1xi32>
    %38 = arith.sitofp %37 : vector<32x1xi32> to vector<32x1xf32>
    %39 = vector.broadcast %38 : vector<32x1xf32> to vector<32x16xf32>
    %40 = arith.mulf %34, %39 : vector<32x16xf32>
    %41 = arith.addf %16, %40 : vector<32x16xf32>
    %c4_i32 = arith.constant 4 : i32
    %42 = tpu.dynamic_rotate %16 by %c4_i32 dim 0 : vector<32x16xf32>, i32 -> vector<32x16xf32>
    %c4_i32_21 = arith.constant 4 : i32
    %43 = vector.broadcast %c4_i32_21 : i32 to vector<32x1xi32>
    %44 = arith.cmpi sge, %33, %43 : vector<32x1xi32>
    %45 = arith.extui %44 : vector<32x1xi1> to vector<32x1xi32>
    %46 = arith.sitofp %45 : vector<32x1xi32> to vector<32x1xf32>
    %47 = vector.broadcast %46 : vector<32x1xf32> to vector<32x16xf32>
    %48 = arith.mulf %42, %47 : vector<32x16xf32>
    %49 = arith.addf %41, %48 : vector<32x16xf32>
    %c0_22 = arith.constant 0 : index
    %c0_23 = arith.constant 0 : index
    %50 = vector.load %arg3[%c0_22, %c0_23] : memref<32x16xf32, #tpu.memory_space<vmem>>, vector<32x16xf32>
    tpu.vector_store %arg3[%c0_22, %c0_23], %49 {strides = array<i32>} : memref<32x16xf32, #tpu.memory_space<vmem>>, vector<32x16xf32>,
    return
  }
  func.func @transform_0(%arg0: i32) -> (i32, i32, i32) {
    %c0_i32 = arith.constant 0 : i32
    %c0_i32_0 = arith.constant 0 : i32
    %c0_i32_1 = arith.constant 0 : i32
    return %c0_i32, %arg0, %c0_i32_0 : i32, i32, i32
  }
  func.func @transform_1(%arg0: i32) -> (i32, i32, i32) {
    %c0_i32 = arith.constant 0 : i32
    %c0_i32_0 = arith.constant 0 : i32
    %c0_i32_1 = arith.constant 0 : i32
    %c0_i32_2 = arith.constant 0 : i32
    return %c0_i32, %c0_i32_0, %c0_i32_1 : i32, i32, i32
  }
  func.func @transform_2(%arg0: i32) -> (i32, i32) {
    %c0_i32 = arith.constant 0 : i32
    %c0_i32_0 = arith.constant 0 : i32
    return %arg0, %c0_i32 : i32, i32
  }
}

</mosaic_0001>

<llo_original>
// kernel: aggregate_stgcn.1
$region0: #{aggregate_stgcn.1}
  #allocation0 [shape = 'u32[]', space=smem, size = 0x4, offset = 0x4, fixed_abs, tag = 'smem constant byte address 0x4 - core index']
  #allocation1 [shape = 'u32[144,128]{1,0:T(1,128)}', space=vmem, size = 0x12000, scoped, tag = 'internal scratch']
  %s0 = inlined_call_operand.vmem [shape: f32[3,64,16], index: 0, kind: input, shape index: {}]
  %s1 = inlined_call_operand.vmem [shape: f32[3,16,16], index: 1, kind: input, shape index: {}]
  %s2 = inlined_call_operand.hbm [shape: f32[64,16], index: 2, kind: output, shape index: {}]
  %s3 = sld [smem:[#allocation0]]
  $region79: #{aggregate_stgcn.1} parent=0
    _
  %s5 = ssub.s32 1, %s3
  %s6 = scalar_select 0, %s5, %s3
  $region1: #{aggregate_stgcn.1} parent=0
    #allocation2 [shape = 'u8[98304]{0}', space=vmem, size = 0x18000, scoped, tag = 'input window, operand 0']
    #allocation3 [shape = 'u8[32768]{0}', space=vmem, size = 0x8000, scoped, tag = 'output window, operand 0']
    #allocation4 [shape = 's32[2]{0}', space=sflag, size = 0x8, scoped, tag = 'scoped memory for aggregate_stgcn.1']
    %7 = vsyncpa [#allocation4], 0
    %s8 = scalar_lea.sflag [#allocation4], 1
    %9 = vsyncpa %s8, 0
    loop: start=0, step=1, limit=4
    $region2: #{aggregate_stgcn.1} parent=1 // loop_pre_header
      _
    $region3: #{aggregate_stgcn.1} parent=1 // loop_header
      %s11 = sphi 0, %s15
      %p12 = scmp.ge.s32.totalorder %s11, 4
      %s21 = sphi 0, %s23
      %s24 = sphi 0, %s21
      %s25 = sphi 0, %s24
      %s41 = sphi 0, %s25
      %s45 = sphi 0, %s45
      %s47 = sphi 0, %s45
      %s48 = sphi 0, %s47
      %s62 = sphi 0, %s48
      %s68 = sphi 0, %s70
      %s71 = sphi 0, %s68
      %s72 = sphi 0, %s71
      %s88 = sphi 0, %s72
    $region4: #{aggregate_stgcn.1} parent=1 // loop_header_branch
      %14 = sbr.rel (%p12) target = $region8
    $region5: #{aggregate_stgcn.1} parent=1 // loop_body
      %s16 = ssub.s32 %s11, 1
      %s17 = ssub.s32 %s11, 2
      %s18 = sadd.s32 %s11, 1
      %s19 = ssub.s32 %s11, %s18
      %p20 = scmp.eq.s32.totalorder %s19, 0
      %s22 = sadd.s32 %s21, 1
      %s23 = scalar_select %p20, %s21, %s22
      %p26 = pneg %p20
      %p27 = scmp.eq.s32.totalorder %s11, 1
      %p28 = por %p26, %p27
      %p29 = scmp.ne.s32.totalorder %s21, %s24
      %p30 = scmp.eq.s32.totalorder %s11, 0
      %p31 = por %p29, %p30
      %p32 = scmp.ne.s32.totalorder %s21, %s24
      %p33 = scmp.eq.s32.totalorder %s16, 1
      %p34 = por %p32, %p33
      %p35 = scmp.ne.s32.totalorder %s24, %s25
      %p36 = scmp.eq.s32.totalorder %s16, 0
      %p37 = por %p35, %p36
      %p38 = scmp.ne.s32.totalorder %s24, %s25
      %p39 = scmp.eq.s32.totalorder %s17, 1
      %p40 = por %p38, %p39
      %p42 = scmp.ne.s32.totalorder %s25, %s41
      %p43 = scmp.eq.s32.totalorder %s17, 0
      %p44 = por %p42, %p43
      %s46 = sadd.s32 %s45, 1
      %p49 = scmp.eq.s32.totalorder %s11, 1
      %p50 = scmp.ne.s32.totalorder %s45, %s47
      %p51 = scmp.eq.s32.totalorder %s11, 0
      %p52 = por %p50, %p51
      %p53 = scmp.ne.s32.totalorder %s45, %s47
      %p54 = scmp.eq.s32.totalorder %s16, 1
      %p55 = por %p53, %p54
      %p56 = scmp.ne.s32.totalorder %s47, %s48
      %p57 = scmp.eq.s32.totalorder %s16, 0
      %p58 = por %p56, %p57
      %p59 = scmp.ne.s32.totalorder %s47, %s48
      %p60 = scmp.eq.s32.totalorder %s17, 1
      %p61 = por %p59, %p60
      %p63 = scmp.ne.s32.totalorder %s48, %s62
      %p64 = scmp.eq.s32.totalorder %s17, 0
      %p65 = por %p63, %p64
      %s66 = ssub.s32 %s11, %s18
      %p67 = scmp.eq.s32.totalorder %s66, 0
      %s69 = sadd.s32 %s68, 1
      %s70 = scalar_select %p67, %s68, %s69
      %p73 = pneg %p67
      %p74 = scmp.eq.s32.totalorder %s11, 1
      %p75 = por %p73, %p74
      %p76 = scmp.ne.s32.totalorder %s68, %s71
      %p77 = scmp.eq.s32.totalorder %s11, 0
      %p78 = por %p76, %p77
      %p79 = scmp.ne.s32.totalorder %s68, %s71
      %p80 = scmp.eq.s32.totalorder %s16, 1
      %p81 = por %p79, %p80
      %p82 = scmp.ne.s32.totalorder %s71, %s72
      %p83 = scmp.eq.s32.totalorder %s16, 0
      %p84 = por %p82, %p83
      %p85 = scmp.ne.s32.totalorder %s71, %s72
      %p86 = scmp.eq.s32.totalorder %s17, 1
      %p87 = por %p85, %p86
      %p89 = scmp.ne.s32.totalorder %s72, %s88
      %p90 = scmp.eq.s32.totalorder %s17, 0
      %p91 = por %p89, %p90
      %p92 = scmp.le.s32.totalorder 1, %s11
      %p93 = scmp.lt.s32.totalorder %s11, 3
      %p94 = pnand %p92, %p93
      %p95 = pneg %p94
      // Predicated region
      $region9: #{aggregate_stgcn.1} parent=5 // pred_check
        _
      $region10: #{aggregate_stgcn.1} parent=5 // pred_check_branch
        %97 = sbr.rel (%p94) target = $region12
      $region11: #{aggregate_stgcn.1} parent=5 // pred_region
        %s98 = ssub.s32 %s11, 1
        // Predicated region
        $region13: #{aggregate_stgcn.1} parent=11 // pred_check
          %p99 = pneg %p58
        $region14: #{aggregate_stgcn.1} parent=11 // pred_check_branch
          %101 = sbr.rel (%p99) target = $region16
        $region15: #{aggregate_stgcn.1} parent=11 // pred_region
          _
        $region16: #{aggregate_stgcn.1} parent=11 // pred_fallthru
          _
      $region12: #{aggregate_stgcn.1} parent=5 // pred_fallthru
        _
      %p102 = scmp.lt.s32.totalorder %s11, 2
      // Predicated region
      $region17: #{aggregate_stgcn.1} parent=5 // pred_check
        %p103 = pneg %p102
      $region18: #{aggregate_stgcn.1} parent=5 // pred_check_branch
        %105 = sbr.rel (%p103) target = $region20
      $region19: #{aggregate_stgcn.1} parent=5 // pred_region
        // Predicated region
        $region21: #{aggregate_stgcn.1} parent=19 // pred_check
          %p106 = pneg %p31
        $region22: #{aggregate_stgcn.1} parent=19 // pred_check_branch
          %108 = sbr.rel (%p106) target = $region24
        $region23: #{aggregate_stgcn.1} parent=19 // pred_region
          %s109 = sand.u32 %s21, 1
          %s110 = sand.u32 %s21, 1
          %s111 = smul.addr %s110, 96
          %s112 = scalar_lea.vmem [#allocation2], %s111
          %s113 = smul.u32 4, %s11
          %s114 = smul.addr %s113, 8
          %s115 = scalar_lea.vmem %s0, %s114
          // Predicated region
          $region25: #{aggregate_stgcn.1} parent=23 // pred_check
            _
          $region26: #{aggregate_stgcn.1} parent=23 // pred_check_branch
            %117 = sbr.rel (0) target = $region28
          $region27: #{aggregate_stgcn.1} parent=23 // pred_region
            // Predicated region
            $region29: #{aggregate_stgcn.1} parent=27 // pred_check
              _
            $region30: #{aggregate_stgcn.1} parent=27 // pred_check_branch
              %119 = sbr.rel (0) target = $region32
            $region31: #{aggregate_stgcn.1} parent=27 // pred_region
              // Predicated region
              $region44: #{aggregate_stgcn.1} parent=31 // pred_check
                _
              $region45: #{aggregate_stgcn.1} parent=31 // pred_check_branch
                %157 = sbr.rel (0) target = $region47
              $region46: #{aggregate_stgcn.1} parent=31 // pred_region
                loop: start=0, step=1, limit=1
                $region48: #{aggregate_stgcn.1} parent=46 // loop_pre_header
                  _
                $region49: #{aggregate_stgcn.1} parent=46 // loop_header
                  %s159 = sphi 0, %s163
                  %p160 = scmp.ge.s32.totalorder %s159, 1
                  %s164 = sphi %s115, %s115
                  %s165 = sphi %s112, %s112
                $region50: #{aggregate_stgcn.1} parent=46 // loop_header_branch
                  %162 = sbr.rel (%p160) target = $region54
                $region51: #{aggregate_stgcn.1} parent=46 // loop_body
                  %v166 = vld [vmem:[%s164] sm:$0xff]
                  %167 = vst [vmem:[%s165] sm:$0xff] %v166
                  %v168 = vld [vmem:[%s164 + $0x8] sm:$0xff]
                  %169 = vst [vmem:[%s165 + $0x8] sm:$0xff] %v168
                  %v170 = vld [vmem:[%s164 + $0x10] sm:$0xff]
                  %171 = vst [vmem:[%s165 + $0x10] sm:$0xff] %v170
                  %v172 = vld [vmem:[%s164 + $0x18] sm:$0xff]
                  %173 = vst [vmem:[%s165 + $0x18] sm:$0xff] %v172
                  %v174 = vld [vmem:[%s164 + $0x40] sm:$0xff]
                  %175 = vst [vmem:[%s165 + $0x20] sm:$0xff] %v174
                  %v176 = vld [vmem:[%s164 + $0x48] sm:$0xff]
                  %177 = vst [vmem:[%s165 + $0x28] sm:$0xff] %v176
                  %v178 = vld [vmem:[%s164 + $0x50] sm:$0xff]
                  %179 = vst [vmem:[%s165 + $0x30] sm:$0xff] %v178
                  %v180 = vld [vmem:[%s164 + $0x58] sm:$0xff]
                  %181 = vst [vmem:[%s165 + $0x38] sm:$0xff] %v180
                  %v182 = vld [vmem:[%s164 + $0x80] sm:$0xff]
                  %183 = vst [vmem:[%s165 + $0x40] sm:$0xff] %v182
                  %v184 = vld [vmem:[%s164 + $0x88] sm:$0xff]
                  %185 = vst [vmem:[%s165 + $0x48] sm:$0xff] %v184
                  %v186 = vld [vmem:[%s164 + $0x90] sm:$0xff]
                  %187 = vst [vmem:[%s165 + $0x50] sm:$0xff] %v186
                  %v188 = vld [vmem:[%s164 + $0x98] sm:$0xff]
                  %189 = vst [vmem:[%s165 + $0x58] sm:$0xff] %v188
                $region52: #{aggregate_stgcn.1} parent=46 // loop_footer
                  %s163 = sadd.s32 1, %s159
                $region53: #{aggregate_stgcn.1} parent=46 // loop_footer_branch
                  %158 = sbr.rel target = $region49
                $region54: #{aggregate_stgcn.1} parent=46 // loop_exit
                  _
              $region47: #{aggregate_stgcn.1} parent=31 // pred_fallthru
                _
              // Predicated region
              $region55: #{aggregate_stgcn.1} parent=31 // pred_check
                _
              $region56: #{aggregate_stgcn.1} parent=31 // pred_check_branch
                %191 = sbr.rel target = $region58
              $region57: #{aggregate_stgcn.1} parent=31 // pred_region
                _
              $region58: #{aggregate_stgcn.1} parent=31 // pred_fallthru
                _
            $region32: #{aggregate_stgcn.1} parent=27 // pred_fallthru
              _
            // Predicated region
            $region33: #{aggregate_stgcn.1} parent=27 // pred_check
              _
            $region34: #{aggregate_stgcn.1} parent=27 // pred_check_branch
              %121 = sbr.rel target = $region36
            $region35: #{aggregate_stgcn.1} parent=27 // pred_region
              %s123 = ssub.s32 256, 1
              loop: start=0, step=1, limit=1
              $region37: #{aggregate_stgcn.1} parent=35 // loop_pre_header
                _
              $region38: #{aggregate_stgcn.1} parent=35 // loop_header
                %s125 = sphi 0, %s129
                %p126 = scmp.ge.s32.totalorder %s125, 1
                %s130 = sphi %s115, %s115
                %s131 = sphi %s112, %s112
              $region39: #{aggregate_stgcn.1} parent=35 // loop_header_branch
                %128 = sbr.rel (%p126) target = $region43
              $region40: #{aggregate_stgcn.1} parent=35 // loop_body
                %v132 = vld [vmem:[%s130] sm:%s123]
                %133 = vst [vmem:[%s131] sm:%s123] %v132
                %v134 = vld [vmem:[%s130 + $0x8] sm:%s123]
                %135 = vst [vmem:[%s131 + $0x8] sm:%s123] %v134
                %v136 = vld [vmem:[%s130 + $0x10] sm:%s123]
                %137 = vst [vmem:[%s131 + $0x10] sm:%s123] %v136
                %v138 = vld [vmem:[%s130 + $0x18] sm:%s123]
                %139 = vst [vmem:[%s131 + $0x18] sm:%s123] %v138
                %v140 = vld [vmem:[%s130 + $0x40] sm:%s123]
                %141 = vst [vmem:[%s131 + $0x20] sm:%s123] %v140
                %v142 = vld [vmem:[%s130 + $0x48] sm:%s123]
                %143 = vst [vmem:[%s131 + $0x28] sm:%s123] %v142
                %v144 = vld [vmem:[%s130 + $0x50] sm:%s123]
                %145 = vst [vmem:[%s131 + $0x30] sm:%s123] %v144
                %v146 = vld [vmem:[%s130 + $0x58] sm:%s123]
                %147 = vst [vmem:[%s131 + $0x38] sm:%s123] %v146
                %v148 = vld [vmem:[%s130 + $0x80] sm:%s123]
                %149 = vst [vmem:[%s131 + $0x40] sm:%s123] %v148
                %v150 = vld [vmem:[%s130 + $0x88] sm:%s123]
                %151 = vst [vmem:[%s131 + $0x48] sm:%s123] %v150
                %v152 = vld [vmem:[%s130 + $0x90] sm:%s123]
                %153 = vst [vmem:[%s131 + $0x50] sm:%s123] %v152
                %v154 = vld [vmem:[%s130 + $0x98] sm:%s123]
                %155 = vst [vmem:[%s131 + $0x58] sm:%s123] %v154
              $region41: #{aggregate_stgcn.1} parent=35 // loop_footer
                %s129 = sadd.s32 1, %s125
              $region42: #{aggregate_stgcn.1} parent=35 // loop_footer_branch
                %124 = sbr.rel target = $region38
              $region43: #{aggregate_stgcn.1} parent=35 // loop_exit
                _
            $region36: #{aggregate_stgcn.1} parent=27 // pred_fallthru
              _
          $region28: #{aggregate_stgcn.1} parent=23 // pred_fallthru
            _
          %192 = vnop
        $region24: #{aggregate_stgcn.1} parent=19 // pred_fallthru
          _
      $region20: #{aggregate_stgcn.1} parent=5 // pred_fallthru
        _
      %p193 = scmp.le.s32.totalorder 1, %s11
      %p194 = scmp.lt.s32.totalorder %s11, 3
      %p195 = pnand %p193, %p194
      %p196 = pneg %p195
      // Predicated region
      $region59: #{aggregate_stgcn.1} parent=5 // pred_check
        _
      $region60: #{aggregate_stgcn.1} parent=5 // pred_check_branch
        %198 = sbr.rel (%p195) target = $region62
      $region61: #{aggregate_stgcn.1} parent=5 // pred_region
        %s199 = ssub.s32 %s11, 1
        %s200 = sand.u32 %s24, 1
        %s201 = sand.u32 %s24, 1
        %s202 = smul.addr %s201, 96
        %s203 = scalar_lea.vmem [#allocation2], %s202
        // Predicated region
        $region63: #{aggregate_stgcn.1} parent=61 // pred_check
          %p204 = pneg %p37
        $region64: #{aggregate_stgcn.1} parent=61 // pred_check_branch
          %206 = sbr.rel (%p204) target = $region66
        $region65: #{aggregate_stgcn.1} parent=61 // pred_region
          _
        $region66: #{aggregate_stgcn.1} parent=61 // pred_fallthru
          _
        %s207 = sand.u32 %s24, 1
        %s208 = sand.u32 %s24, 1
        %s209 = smul.addr %s208, 96
        %s210 = scalar_lea.vmem [#allocation2], %s209
        %p211 = pneg %p37
        %p212 = pneg %p34
        %p213 = pneg %p58
        %p214 = pneg %p55
        %p215 = pneg %p84
        %p216 = pneg %p81
        %s217 = sand.u32 %s71, 1
        %s218 = scalar_lea.sflag [#allocation4], %s217
        %s219 = sand.u32 %s71, 1
        %s220 = smul.addr %s219, 32
        %s221 = scalar_lea.vmem [#allocation3], %s220
        %s222 = smul.u32 4, %s16
        %s223 = smul.u32 4, %s16
        %v224 = vld [vmem:[%s203] sm:$0xff]
        %v225 = vld [vmem:[%s203 + $0x8] sm:$0xff]
        %v226 = vld [vmem:[%s203 + $0x10] sm:$0xff]
        %v227 = vld [vmem:[%s203 + $0x18] sm:$0xff]
        %v228 = vld [vmem:[%s1] sm:$0xff]
        %v229 = vld [vmem:[%s1 + $0x8] sm:$0xff]
        %s230 = scalar_lea.vmem %s203, 32 [#allocation2]
        %v231 = vld [vmem:[%s230] sm:$0xff]
        %v232 = vld [vmem:[%s230 + $0x8] sm:$0xff]
        %v233 = vld [vmem:[%s230 + $0x10] sm:$0xff]
        %v234 = vld [vmem:[%s230 + $0x18] sm:$0xff]
        %s235 = scalar_lea.vmem %s1, 16
        %v236 = vld [vmem:[%s235] sm:$0xff]
        %v237 = vld [vmem:[%s235 + $0x8] sm:$0xff]
        %vm238 = vcmask 130048
        %v240 = vsel %vm238, %v231, 0
        %v243 = vsel %vm238, %v232, 0
        %v246 = vsel %vm238, %v233, 0
        %v249 = vsel %vm238, %v234, 0
        %251 = vmatprep.subr.mxu0 0.0
        %252 = vmatpush1.msra.mxu0 0.0
        %253 = vmatprep.subr.mxu0 0.0
        %254 = vmatpush1.msra.mxu0 0.0
        %255 = vmatprep.subr.mxu0 0.0
        %256 = vmatpush1.msra.mxu0 0.0
        %257 = vmatprep.subr.mxu0 0.0
        %258 = vmatpush1.msra.mxu0 0.0
        %259 = vmatprep.subr.mxu0 0.0
        %260 = vmatpush1.msra.mxu0 0.0
        %261 = vmatprep.subr.mxu0 0.0
        %262 = vmatpush1.msra.mxu0 0.0
        %263 = vmatprep.subr.mxu0 0.0
        %264 = vmatpush1.msra.mxu0 0.0
        %265 = vmatprep.subr.mxu0 0.0
        %266 = vmatpush1.msra.mxu0 0.0
        %267 = vmatprep.subr.mxu0 0.0
        %268 = vmatpush1.msra.mxu0 0.0
        %269 = vmatprep.subr.mxu0 0.0
        %270 = vmatpush1.msra.mxu0 0.0
        %271 = vmatprep.subr.mxu0 0.0
        %272 = vmatpush1.msra.mxu0 0.0
        %273 = vmatprep.subr.mxu0 0.0
        %274 = vmatpush1.msra.mxu0 0.0
        %275 = vmatprep.subr.mxu0 0.0
        %276 = vmatpush1.msra.mxu0 0.0
        %277 = vmatprep.subr.mxu0 0.0
        %278 = vmatpush1.msra.mxu0 0.0
        %279 = vmatprep.subr.mxu0 0.0
        %280 = vmatpush1.msra.mxu0 %v237
        %281 = vmatprep.subr.mxu0 0.0
        %282 = vmatpush1.msra.mxu0 %v236
        %283 = vmatprep.subr.mxu0 0.0
        %284 = vmatpush2.msra.mxu0 0.0
        %285 = vmatprep.subr.mxu0 0.0
        %286 = vmatpush2.msra.mxu0 0.0
        %287 = vmatprep.subr.mxu0 0.0
        %288 = vmatpush2.msra.mxu0 0.0
        %289 = vmatprep.subr.mxu0 0.0
        %290 = vmatpush2.msra.mxu0 0.0
        %291 = vmatprep.subr.mxu0 0.0
        %292 = vmatpush2.msra.mxu0 0.0
        %293 = vmatprep.subr.mxu0 0.0
        %294 = vmatpush2.msra.mxu0 0.0
        %295 = vmatprep.subr.mxu0 0.0
        %296 = vmatpush2.msra.mxu0 0.0
        %297 = vmatprep.subr.mxu0 0.0
        %298 = vmatpush2.msra.mxu0 0.0
        %299 = vmatprep.subr.mxu0 0.0
        %300 = vmatpush2.msra.mxu0 0.0
        %301 = vmatprep.subr.mxu0 0.0
        %302 = vmatpush2.msra.mxu0 0.0
        %303 = vmatprep.subr.mxu0 0.0
        %304 = vmatpush2.msra.mxu0 0.0
        %305 = vmatprep.subr.mxu0 0.0
        %306 = vmatpush2.msra.mxu0 0.0
        %307 = vmatprep.subr.mxu0 0.0
        %308 = vmatpush2.msra.mxu0 0.0
        %309 = vmatprep.subr.mxu0 0.0
        %310 = vmatpush2.msra.mxu0 0.0
        %311 = vmatprep.subr.mxu0 0.0
        %312 = vmatpush2.msra.mxu0 0.0
        %313 = vmatprep.subr.mxu0 0.0
        %314 = vmatpush2.msra.mxu0 0.0
        %315 = vmatprep.mubr.f32.mxu0 0.0
        %316 = vmatmul.mubr.f32.gmra.mxu0 %v240
        %v317 = vpop.f32.mrf.mxu0
        %v318 = vadd.f32 0.0, %v317
        %v319 = vpop.f32.mrf.mxu0
        %320 = vmatprep.mubr.f32.mxu0 0.0
        %321 = vmatmul.mubr.f32.gmra.mxu0 %v243
        %v322 = vpop.f32.mrf.mxu0
        %v323 = vadd.f32 0.0, %v322
        %v324 = vpop.f32.mrf.mxu0
        %325 = vmatprep.mubr.f32.mxu0 0.0
        %326 = vmatmul.mubr.f32.gmra.mxu0 %v246
        %v327 = vpop.f32.mrf.mxu0
        %v328 = vadd.f32 0.0, %v327
        %v329 = vpop.f32.mrf.mxu0
        %330 = vmatprep.mubr.f32.mxu0 0.0
        %331 = vmatmul.mubr.f32.gmra.mxu0 %v249
        %v332 = vpop.f32.mrf.mxu0
        %v333 = vadd.f32 0.0, %v332
        %v334 = vpop.f32.mrf.mxu0
        %335 = vdwg.mxu0
        %v337 = vsel %vm238, %v224, 0
        %v340 = vsel %vm238, %v225, 0
        %v343 = vsel %vm238, %v226, 0
        %v346 = vsel %vm238, %v227, 0
        %348 = vmatprep.subr.mxu0 0.0
        %349 = vmatpush1.msra.mxu0 0.0
        %350 = vmatprep.subr.mxu0 0.0
        %351 = vmatpush1.msra.mxu0 0.0
        %352 = vmatprep.subr.mxu0 0.0
        %353 = vmatpush1.msra.mxu0 0.0
        %354 = vmatprep.subr.mxu0 0.0
        %355 = vmatpush1.msra.mxu0 0.0
        %356 = vmatprep.subr.mxu0 0.0
        %357 = vmatpush1.msra.mxu0 0.0
        %358 = vmatprep.subr.mxu0 0.0
        %359 = vmatpush1.msra.mxu0 0.0
        %360 = vmatprep.subr.mxu0 0.0
        %361 = vmatpush1.msra.mxu0 0.0
        %362 = vmatprep.subr.mxu0 0.0
        %363 = vmatpush1.msra.mxu0 0.0
        %364 = vmatprep.subr.mxu0 0.0
        %365 = vmatpush1.msra.mxu0 0.0
        %366 = vmatprep.subr.mxu0 0.0
        %367 = vmatpush1.msra.mxu0 0.0
        %368 = vmatprep.subr.mxu0 0.0
        %369 = vmatpush1.msra.mxu0 0.0
        %370 = vmatprep.subr.mxu0 0.0
        %371 = vmatpush1.msra.mxu0 0.0
        %372 = vmatprep.subr.mxu0 0.0
        %373 = vmatpush1.msra.mxu0 0.0
        %374 = vmatprep.subr.mxu0 0.0
        %375 = vmatpush1.msra.mxu0 0.0
        %376 = vmatprep.subr.mxu0 0.0
        %377 = vmatpush1.msra.mxu0 %v229
        %378 = vmatprep.subr.mxu0 0.0
        %379 = vmatpush1.msra.mxu0 %v228
        %380 = vmatprep.subr.mxu0 0.0
        %381 = vmatpush2.msra.mxu0 0.0
        %382 = vmatprep.subr.mxu0 0.0
        %383 = vmatpush2.msra.mxu0 0.0
        %384 = vmatprep.subr.mxu0 0.0
        %385 = vmatpush2.msra.mxu0 0.0
        %386 = vmatprep.subr.mxu0 0.0
        %387 = vmatpush2.msra.mxu0 0.0
        %388 = vmatprep.subr.mxu0 0.0
        %389 = vmatpush2.msra.mxu0 0.0
        %390 = vmatprep.subr.mxu0 0.0
        %391 = vmatpush2.msra.mxu0 0.0
        %392 = vmatprep.subr.mxu0 0.0
        %393 = vmatpush2.msra.mxu0 0.0
        %394 = vmatprep.subr.mxu0 0.0
        %395 = vmatpush2.msra.mxu0 0.0
        %396 = vmatprep.subr.mxu0 0.0
        %397 = vmatpush2.msra.mxu0 0.0
        %398 = vmatprep.subr.mxu0 0.0
        %399 = vmatpush2.msra.mxu0 0.0
        %400 = vmatprep.subr.mxu0 0.0
        %401 = vmatpush2.msra.mxu0 0.0
        %402 = vmatprep.subr.mxu0 0.0
        %403 = vmatpush2.msra.mxu0 0.0
        %404 = vmatprep.subr.mxu0 0.0
        %405 = vmatpush2.msra.mxu0 0.0
        %406 = vmatprep.subr.mxu0 0.0
        %407 = vmatpush2.msra.mxu0 0.0
        %408 = vmatprep.subr.mxu0 0.0
        %409 = vmatpush2.msra.mxu0 0.0
        %410 = vmatprep.subr.mxu0 0.0
        %411 = vmatpush2.msra.mxu0 0.0
        %412 = vmatprep.mubr.f32.mxu0 0.0
        %413 = vmatmul.mubr.f32.gmra.mxu0 %v337
        %v414 = vpop.f32.mrf.mxu0
        %v415 = vadd.f32 %v318, %v414
        %v416 = vpop.f32.mrf.mxu0
        %417 = vmatprep.mubr.f32.mxu0 0.0
        %418 = vmatmul.mubr.f32.gmra.mxu0 %v340
        %v419 = vpop.f32.mrf.mxu0
        %v420 = vadd.f32 %v323, %v419
        %v421 = vpop.f32.mrf.mxu0
        %422 = vmatprep.mubr.f32.mxu0 0.0
        %423 = vmatmul.mubr.f32.gmra.mxu0 %v343
        %v424 = vpop.f32.mrf.mxu0
        %v425 = vadd.f32 %v328, %v424
        %v426 = vpop.f32.mrf.mxu0
        %427 = vmatprep.mubr.f32.mxu0 0.0
        %428 = vmatmul.mubr.f32.gmra.mxu0 %v346
        %v429 = vpop.f32.mrf.mxu0
        %v430 = vadd.f32 %v333, %v429
        %v431 = vpop.f32.mrf.mxu0
        %432 = vdwg.mxu0
        %s433 = scalar_lea.vmem %s203, 64 [#allocation2]
        %v434 = vld [vmem:[%s433] sm:$0xff]
        %v435 = vld [vmem:[%s433 + $0x8] sm:$0xff]
        %v436 = vld [vmem:[%s433 + $0x10] sm:$0xff]
        %v437 = vld [vmem:[%s433 + $0x18] sm:$0xff]
        %s438 = scalar_lea.vmem %s1, 32
        %v439 = vld [vmem:[%s438] sm:$0xff]
        %v440 = vld [vmem:[%s438 + $0x8] sm:$0xff]
        %v442 = vsel %vm238, %v434, 0
        %v445 = vsel %vm238, %v435, 0
        %v448 = vsel %vm238, %v436, 0
        %v451 = vsel %vm238, %v437, 0
        %453 = vmatprep.subr.mxu0 0.0
        %454 = vmatpush1.msra.mxu0 0.0
        %455 = vmatprep.subr.mxu0 0.0
        %456 = vmatpush1.msra.mxu0 0.0
        %457 = vmatprep.subr.mxu0 0.0
        %458 = vmatpush1.msra.mxu0 0.0
        %459 = vmatprep.subr.mxu0 0.0
        %460 = vmatpush1.msra.mxu0 0.0
        %461 = vmatprep.subr.mxu0 0.0
        %462 = vmatpush1.msra.mxu0 0.0
        %463 = vmatprep.subr.mxu0 0.0
        %464 = vmatpush1.msra.mxu0 0.0
        %465 = vmatprep.subr.mxu0 0.0
        %466 = vmatpush1.msra.mxu0 0.0
        %467 = vmatprep.subr.mxu0 0.0
        %468 = vmatpush1.msra.mxu0 0.0
        %469 = vmatprep.subr.mxu0 0.0
        %470 = vmatpush1.msra.mxu0 0.0
        %471 = vmatprep.subr.mxu0 0.0
        %472 = vmatpush1.msra.mxu0 0.0
        %473 = vmatprep.subr.mxu0 0.0
        %474 = vmatpush1.msra.mxu0 0.0
        %475 = vmatprep.subr.mxu0 0.0
        %476 = vmatpush1.msra.mxu0 0.0
        %477 = vmatprep.subr.mxu0 0.0
        %478 = vmatpush1.msra.mxu0 0.0
        %479 = vmatprep.subr.mxu0 0.0
        %480 = vmatpush1.msra.mxu0 0.0
        %481 = vmatprep.subr.mxu0 0.0
        %482 = vmatpush1.msra.mxu0 %v440
        %483 = vmatprep.subr.mxu0 0.0
        %484 = vmatpush1.msra.mxu0 %v439
        %485 = vmatprep.subr.mxu0 0.0
        %486 = vmatpush2.msra.mxu0 0.0
        %487 = vmatprep.subr.mxu0 0.0
        %488 = vmatpush2.msra.mxu0 0.0
        %489 = vmatprep.subr.mxu0 0.0
        %490 = vmatpush2.msra.mxu0 0.0
        %491 = vmatprep.subr.mxu0 0.0
        %492 = vmatpush2.msra.mxu0 0.0
        %493 = vmatprep.subr.mxu0 0.0
        %494 = vmatpush2.msra.mxu0 0.0
        %495 = vmatprep.subr.mxu0 0.0
        %496 = vmatpush2.msra.mxu0 0.0
        %497 = vmatprep.subr.mxu0 0.0
        %498 = vmatpush2.msra.mxu0 0.0
        %499 = vmatprep.subr.mxu0 0.0
        %500 = vmatpush2.msra.mxu0 0.0
        %501 = vmatprep.subr.mxu0 0.0
        %502 = vmatpush2.msra.mxu0 0.0
        %503 = vmatprep.subr.mxu0 0.0
        %504 = vmatpush2.msra.mxu0 0.0
        %505 = vmatprep.subr.mxu0 0.0
        %506 = vmatpush2.msra.mxu0 0.0
        %507 = vmatprep.subr.mxu0 0.0
        %508 = vmatpush2.msra.mxu0 0.0
        %509 = vmatprep.subr.mxu0 0.0
        %510 = vmatpush2.msra.mxu0 0.0
        %511 = vmatprep.subr.mxu0 0.0
        %512 = vmatpush2.msra.mxu0 0.0
        %513 = vmatprep.subr.mxu0 0.0
        %514 = vmatpush2.msra.mxu0 0.0
        %515 = vmatprep.subr.mxu0 0.0
        %516 = vmatpush2.msra.mxu0 0.0
        %517 = vmatprep.mubr.f32.mxu0 0.0
        %518 = vmatmul.mubr.f32.gmra.mxu0 %v442
        %v519 = vpop.f32.mrf.mxu0
        %v520 = vadd.f32 0.0, %v519
        %v521 = vpop.f32.mrf.mxu0
        %522 = vmatprep.mubr.f32.mxu0 0.0
        %523 = vmatmul.mubr.f32.gmra.mxu0 %v445
        %v524 = vpop.f32.mrf.mxu0
        %v525 = vadd.f32 0.0, %v524
        %v526 = vpop.f32.mrf.mxu0
        %527 = vmatprep.mubr.f32.mxu0 0.0
        %528 = vmatmul.mubr.f32.gmra.mxu0 %v448
        %v529 = vpop.f32.mrf.mxu0
        %v530 = vadd.f32 0.0, %v529
        %v531 = vpop.f32.mrf.mxu0
        %532 = vmatprep.mubr.f32.mxu0 0.0
        %533 = vmatmul.mubr.f32.gmra.mxu0 %v451
        %v534 = vpop.f32.mrf.mxu0
        %v535 = vadd.f32 0.0, %v534
        %v536 = vpop.f32.mrf.mxu0
        %537 = vdwg.mxu0
        %v538 = vadd.f32 %v415, %v520
        %v539 = vadd.f32 %v420, %v525
        %v540 = vadd.f32 %v425, %v530
        %v541 = vadd.f32 %v430, %v535
        %v542 = vlaneseq
        %v543 = vshrl.u32 %v542, 7
        %v544 = vadd.s32 %v543, 8
        %v545 = vadd.s32 %v543, 16
        %v546 = vadd.s32 %v543, 24
        %vm547 = vcmp.lt.s32.totalorder %v543, 0
        %v548 = vsub.s32 0, %v543
        %v549 = vsel %vm547, %v548, %v543
        %v550 = vshrl.u32 %v549, 3
        %v551 = vand.u32 %v549, 7
        %v552 = vsub.s32 0, %v551
        %v553 = vsel %vm547, %v552, %v551
        %vm554 = vcmp.lt.s32.totalorder %v544, 0
        %v555 = vsub.s32 0, %v544
        %v556 = vsel %vm554, %v555, %v544
        %v557 = vshrl.u32 %v556, 3
        %v558 = vand.u32 %v556, 7
        %v559 = vsub.s32 0, %v558
        %v560 = vsel %vm554, %v559, %v558
        %vm561 = vcmp.lt.s32.totalorder %v545, 0
        %v562 = vsub.s32 0, %v545
        %v563 = vsel %vm561, %v562, %v545
        %v564 = vshrl.u32 %v563, 3
        %v565 = vand.u32 %v563, 7
        %v566 = vsub.s32 0, %v565
        %v567 = vsel %vm561, %v566, %v565
        %vm568 = vcmp.lt.s32.totalorder %v546, 0
        %v569 = vsub.s32 0, %v546
        %v570 = vsel %vm568, %v569, %v546
        %v571 = vshrl.u32 %v570, 3
        %v572 = vand.u32 %v570, 7
        %v573 = vsub.s32 0, %v572
        %v574 = vsel %vm568, %v573, %v572
        %vm575 = vcmp.ne.s32.totalorder %v553, 0
        %vm576 = vcmp.ne.s32.totalorder %v560, 0
        %vm577 = vcmp.ne.s32.totalorder %v567, 0
        %vm578 = vcmp.ne.s32.totalorder %v574, 0
        %vm579 = vcmp.lt.s32.totalorder %v553, 0
        %vm580 = vcmp.lt.s32.totalorder %v560, 0
        %vm581 = vcmp.lt.s32.totalorder %v567, 0
        %vm582 = vcmp.lt.s32.totalorder %v574, 0
        %vm583 = vmand %vm579, %vm575
        %vm584 = vmand %vm580, %vm576
        %vm585 = vmand %vm581, %vm577
        %vm586 = vmand %vm582, %vm578
        %v587 = vadd.s32 %v553, 8
        %v588 = vadd.s32 %v560, 8
        %v589 = vadd.s32 %v567, 8
        %v590 = vadd.s32 %v574, 8
        %v591 = vsel %vm583, %v587, %v553
        %v592 = vsel %vm584, %v588, %v560
        %v593 = vsel %vm585, %v589, %v567
        %v594 = vsel %vm586, %v590, %v574
        %v595 = vrot.slane %v538, 6
        %v596 = vrot.slane %v539, 6
        %v597 = vrot.slane %v540, 6
        %v598 = vrot.slane %v541, 6
        %vm599 = vcmp.lt.s32.totalorder %v543, 2
        %v600 = vsel %vm599, %v597, %v598
        %v601 = vsel %vm599, %v596, %v597
        %v602 = vsel %vm599, %v595, %v596
        %v603 = vsel %vm599, %v598, %v595
        %vm604 = vcmp.ge.s32.totalorder %v591, 2
        %vm605 = vcmp.ge.s32.totalorder %v592, 2
        %vm606 = vcmp.ge.s32.totalorder %v593, 2
        %vm607 = vcmp.ge.s32.totalorder %v594, 2
        %v608 = vsel %vm604, 1, 0
        %v609 = vsel %vm605, 1, 0
        %v610 = vsel %vm606, 1, 0
        %v611 = vsel %vm607, 1, 0
        %v612 = vcvt.s32.f32 %v608
        %v613 = vcvt.s32.f32 %v609
        %v614 = vcvt.s32.f32 %v610
        %v615 = vcvt.s32.f32 %v611
        %v616 = vmul.f32 %v603, %v612
        %v617 = vmul.f32 %v602, %v613
        %v618 = vmul.f32 %v601, %v614
        %v619 = vmul.f32 %v600, %v615
        %v620 = vadd.f32 %v538, %v616
        %v621 = vadd.f32 %v539, %v617
        %v622 = vadd.f32 %v540, %v618
        %v623 = vadd.f32 %v541, %v619
        %v624 = vrot.slane %v538, 4
        %v625 = vrot.slane %v539, 4
        %v626 = vrot.slane %v540, 4
        %v627 = vrot.slane %v541, 4
        %vm628 = vcmp.lt.s32.totalorder %v543, 4
        %v629 = vsel %vm628, %v626, %v627
        %v630 = vsel %vm628, %v625, %v626
        %v631 = vsel %vm628, %v624, %v625
        %v632 = vsel %vm628, %v627, %v624
        %vm633 = vcmp.ge.s32.totalorder %v591, 4
        %vm634 = vcmp.ge.s32.totalorder %v592, 4
        %vm635 = vcmp.ge.s32.totalorder %v593, 4
        %vm636 = vcmp.ge.s32.totalorder %v594, 4
        %v637 = vsel %vm633, 1, 0
        %v638 = vsel %vm634, 1, 0
        %v639 = vsel %vm635, 1, 0
        %v640 = vsel %vm636, 1, 0
        %v641 = vcvt.s32.f32 %v637
        %v642 = vcvt.s32.f32 %v638
        %v643 = vcvt.s32.f32 %v639
        %v644 = vcvt.s32.f32 %v640
        %v645 = vmul.f32 %v632, %v641
        %v646 = vmul.f32 %v631, %v642
        %v647 = vmul.f32 %v630, %v643
        %v648 = vmul.f32 %v629, %v644
        %v649 = vadd.f32 %v620, %v645
        %v650 = vadd.f32 %v621, %v646
        %v651 = vadd.f32 %v622, %v647
        %v652 = vadd.f32 %v623, %v648
        %653 = vst.msk [vmem:[%s221] sm:$0xff] %vm238, %v649
        %654 = vst.msk [vmem:[%s221 + $0x8] sm:$0xff] %vm238, %v650
        %655 = vst.msk [vmem:[%s221 + $0x10] sm:$0xff] %vm238, %v651
        %656 = vst.msk [vmem:[%s221 + $0x18] sm:$0xff] %vm238, %v652
        %s657 = sand.u32 %s71, 1
        %s658 = scalar_lea.sflag [#allocation4], %s657
        %s659 = sand.u32 %s71, 1
        %s660 = smul.addr %s659, 32
        %s661 = scalar_lea.vmem [#allocation3], %s660
        // Predicated region
        $region67: #{aggregate_stgcn.1} parent=61 // pred_check
          %p662 = pneg %p81
        $region68: #{aggregate_stgcn.1} parent=61 // pred_check_branch
          %664 = sbr.rel (%p662) target = $region70
        $region69: #{aggregate_stgcn.1} parent=61 // pred_region
          %s665 = smul.u32 4, %s16
          %s667 = ssub.s32 512, 512
          %668 = vsyncadd %s658, %s667
          %s669 = smul.addr %s665, 128
          %s670 = scalar_lea.hbm %s2, %s669
          %s671 = sshll.u32 %s661, 4
          %s672 = int_to_ptr.vmem [resolvable:$true] %s671
          %677 = dma.vmem_to_hbm [thread:$0]  %s672, 512, %s670, %s658, 128, 128, 8
        $region70: #{aggregate_stgcn.1} parent=61 // pred_fallthru
          _
      $region62: #{aggregate_stgcn.1} parent=5 // pred_fallthru
        _
      %p678 = scmp.le.s32.totalorder 2, %s11
      // Predicated region
      $region71: #{aggregate_stgcn.1} parent=5 // pred_check
        %p679 = pneg %p678
      $region72: #{aggregate_stgcn.1} parent=5 // pred_check_branch
        %681 = sbr.rel (%p679) target = $region74
      $region73: #{aggregate_stgcn.1} parent=5 // pred_region
        %s682 = ssub.s32 %s11, 2
        // Predicated region
        $region75: #{aggregate_stgcn.1} parent=73 // pred_check
          %p683 = pneg %p87
        $region76: #{aggregate_stgcn.1} parent=73 // pred_check_branch
          %685 = sbr.rel (%p683) target = $region78
        $region77: #{aggregate_stgcn.1} parent=73 // pred_region
          %s686 = sand.u32 %s72, 1
          %s687 = scalar_lea.sflag [#allocation4], %s686
          %s688 = sand.u32 %s72, 1
          %s689 = smul.addr %s688, 32
          %s690 = scalar_lea.vmem [#allocation3], %s689
          %691 = dma.done %s687, 512
        $region78: #{aggregate_stgcn.1} parent=73 // pred_fallthru
          _
      $region74: #{aggregate_stgcn.1} parent=5 // pred_fallthru
        _
    $region6: #{aggregate_stgcn.1} parent=1 // loop_footer
      %s15 = sadd.s32 1, %s11
    $region7: #{aggregate_stgcn.1} parent=1 // loop_footer_branch
      %10 = sbr.rel target = $region3
    $region8: #{aggregate_stgcn.1} parent=1 // loop_exit
      _
    %692 = vsyncpa [#allocation4], 1
    %s693 = scalar_lea.sflag [#allocation4], 1
    %694 = vsyncpa %s693, 1

</llo_original>
